<compile_context>
chip_gen: v6e
topology: v6e:2x2x1
jax: 0.10.0
libtpu: 0.0.40
codegen_flags: <defaults>
</compile_context>

<pallas_src>
import jax
import jax.numpy as jnp
from jax.experimental import pallas as pl
from jax.experimental.pallas import tpu as pltpu


def _round_up(x, m):
    return (x + m - 1) // m * m


def _softmax_mlp_kernel(x_ref, w1_ref, b1_ref, w2_ref, b2_ref, o_ref):
    # First linear on the MXU (f32 accumulation), then bias + ReLU in f32.
    h = jnp.dot(x_ref[...], w1_ref[...], preferred_element_type=jnp.float32)
    # Fuse the cast to the second-matmul operand dtype (bf16 on the fast path) so the
    # hidden intermediate lives/spills at half width.
    # Dropout(p=0) / eval mode is the identity.
    h = jnp.maximum(h + b1_ref[...], 0.0).astype(w2_ref.dtype)

    # Second linear (MXU, f32 accumulation) + bias. Padded columns carry a -1e30 bias,
    # so exp underflows to exactly 0 and they contribute nothing to the softmax.
    logits = jnp.dot(h, w2_ref[...], preferred_element_type=jnp.float32)
    logits = logits + b2_ref[...]

    # Numerically-stable softmax along the last (lane) dim. Exact division so every
    # row sums to 1 to f32 precision (approx EUP reciprocal drifts rows by ~1e-3).
    m = jnp.max(logits, axis=-1, keepdims=True)
    e = jnp.exp(logits - m)
    denom = jnp.sum(e, axis=-1, keepdims=True)
    o_ref[...] = (e / denom).astype(o_ref.dtype)


def softmax_mlp(x, w1, b1, w2, b2, *, block_b=512, use_bf16=True):
    """x: [B, input_size]; w1: [input_size, hidden]; b1: [1, hidden];
    w2: [hidden, output]; b2: [1, output].  Returns [B, output] softmax probs."""
    B, in_size = x.shape
    hidden = w1.shape[1]
    out_size = w2.shape[1]
    out_dtype = x.dtype

    # ---- Lane-dense feature dims: pad hidden and output features to x128. ---------
    hid_pad = _round_up(hidden, 128)
    if hid_pad != hidden:
        w1 = jnp.pad(w1, ((0, 0), (0, hid_pad - hidden)))
        b1 = jnp.pad(b1, ((0, 0), (0, hid_pad - hidden)))
        w2 = jnp.pad(w2, ((0, hid_pad - hidden), (0, 0)))
    out_pad = _round_up(out_size, 128)
    if out_pad != out_size:
        w2 = jnp.pad(w2, ((0, 0), (0, out_pad - out_size)))
        # Very negative bias on padded columns -> exp underflows to 0, so the softmax
        # denominator and real-column probabilities are unaffected.
        b2 = jnp.pad(b2, ((0, 0), (0, out_pad - out_size)), constant_values=-1e30)

    # ---- Batch tiling: big tiles keep the MXU M dim full and amortize the ~0.35us --
    # ---- per-grid-step overhead.  bf16 packs 16 sublanes/vreg -> round to 16.     --
    sub = 16 if use_bf16 else 8
    block_b_eff = _round_up(min(block_b, _round_up(B, sub)), sub)
    B_pad = _round_up(B, block_b_eff)
    # Shrink the tile when a ragged batch would be padded by more than ~12.5%
    # (avoids paying up to ~2x FLOPs/DMA for rows that are sliced off).
    while block_b_eff > sub and (B_pad - B) * 8 > B_pad:
        block_b_eff = _round_up(max(block_b_eff // 2, sub), sub)
        B_pad = _round_up(B, block_b_eff)
    if B_pad != B:
        x = jnp.pad(x, ((0, B_pad - B), (0, 0)))

    # ---- bf16 MXU operands; all elementwise math stays f32 inside the kernel. -----
    if use_bf16:
        x = x.astype(jnp.bfloat16)
        w1 = w1.astype(jnp.bfloat16)
        w2 = w2.astype(jnp.bfloat16)
    else:
        x = x.astype(jnp.float32)
        w1 = w1.astype(jnp.float32)
        w2 = w2.astype(jnp.float32)
    b1 = b1.astype(jnp.float32)
    b2 = b2.astype(jnp.float32)

    grid = (B_pad // block_b_eff,)

    flops = 2 * B_pad * (in_size * hid_pad + hid_pad * out_pad)
    bytes_accessed = (
        x.size * x.dtype.itemsize
        + w1.size * w1.dtype.itemsize
        + w2.size * w2.dtype.itemsize
        + b1.size * 4 + b2.size * 4
        + B_pad * out_pad * jnp.dtype(out_dtype).itemsize
    )
    cost = pl.CostEstimate(
        flops=flops,
        transcendentals=B_pad * out_pad,  # one exp per output element
        bytes_accessed=bytes_accessed,
    )

    def _call(single_buffer_weights):
        # Grid-invariant weights/biases (index_map is constant) don't benefit from
        # double-buffering; single-buffer them to halve their VMEM footprint.
        if single_buffer_weights:
            w_kw = dict(pipeline_mode=pl.Buffered(buffer_count=1))
        else:
            w_kw = {}
        grid_spec = pltpu.PrefetchScalarGridSpec(
            num_scalar_prefetch=0,
            grid=grid,
            in_specs=[
                pl.BlockSpec((block_b_eff, in_size), lambda i: (i, 0)),        # x tile
                pl.BlockSpec((in_size, hid_pad), lambda i: (0, 0), **w_kw),    # W1 (resident)
                pl.BlockSpec((1, hid_pad), lambda i: (0, 0), **w_kw),          # b1
                pl.BlockSpec((hid_pad, out_pad), lambda i: (0, 0), **w_kw),    # W2 (resident)
                pl.BlockSpec((1, out_pad), lambda i: (0, 0), **w_kw),          # b2
            ],
            out_specs=pl.BlockSpec((block_b_eff, out_pad), lambda i: (i, 0)),
        )
        return pl.pallas_call(
            _softmax_mlp_kernel,
            out_shape=jax.ShapeDtypeStruct((B_pad, out_pad), out_dtype),
            grid_spec=grid_spec,
            compiler_params=pltpu.CompilerParams(
                dimension_semantics=("parallel",),
                # Above the 16/32 MiB scoped defaults, safely below v7x's 64 MiB.
                vmem_limit_bytes=56 * 1024 * 1024,
            ),
            cost_estimate=cost,
        )(x, w1, b1, w2, b2)

    try:
        out = _call(True)
    except Exception:
        # Fallback for Pallas builds that reject pipeline_mode / buffer_count=1:
        # default double-buffering of the resident weights (correctness identical).
        out = _call(False)

    # Strip batch / lane padding.
    return out[:B, :out_size]


def _xavier_uniform_relu(key, fan_in, fan_out, dtype=jnp.float32):
    """Matches torch.nn.init.xavier_uniform_ with gain=calculate_gain('relu')=sqrt(2)."""
    gain = jnp.sqrt(2.0)
    bound = gain * jnp.sqrt(6.0 / (fan_in + fan_out))
    # PyTorch stores weight as (out, in); we keep it transposed as (in, out) so the
    # kernel does x @ W.  Same i.i.d. uniform distribution either way.
    return jax.random.uniform(key, (fan_in, fan_out), dtype, minval=-bound, maxval=bound)


def _linear_bias(key, fan_in, fan_out, dtype=jnp.float32):
    """Matches torch.nn.Linear default bias init: U(-1/sqrt(fan_in), 1/sqrt(fan_in))."""
    bound = 1.0 / jnp.sqrt(float(fan_in))
    return jax.random.uniform(key, (1, fan_out), dtype, minval=-bound, maxval=bound)


if __name__ == "__main__":
    # Small shapes implied by the module: x [batch, input_size]
    batch, input_size, hidden_size, output_size = 8, 32, 64, 16

    key = jax.random.PRNGKey(0)
    kx, kw1, kb1, kw2, kb2 = jax.random.split(key, 5)

    x = jax.random.normal(kx, (batch, input_size), jnp.float32)
    w1 = _xavier_uniform_relu(kw1, input_size, hidden_size)
    b1 = _linear_bias(kb1, input_size, hidden_size)
    w2 = _xavier_uniform_relu(kw2, hidden_size, output_size)
    b2 = _linear_bias(kb2, hidden_size, output_size)

    # Plain-JAX f32 reference.
    h_ref = jnp.maximum(x @ w1 + b1, 0.0)
    ref = jax.nn.softmax(h_ref @ w2 + b2, axis=-1)

    # Fast path: bf16 MXU operands, f32 accumulation / elementwise / softmax.
    out = jax.block_until_ready(softmax_mlp(x, w1, b1, w2, b2))
    assert out.shape == (batch, output_size)
    assert jnp.allclose(out, ref, atol=2e-2, rtol=2e-2)
    assert jnp.allclose(jnp.sum(out, axis=-1), 1.0, atol=1e-3)

    # Full-precision path for a tight correctness check of the kernel structure.
    out_f32 = jax.block_until_ready(softmax_mlp(x, w1, b1, w2, b2, use_bf16=False))
    assert out_f32.shape == (batch, output_size)
    assert jnp.allclose(out_f32, ref, atol=1e-4, rtol=1e-4)
    assert jnp.allclose(jnp.sum(out_f32, axis=-1), 1.0, atol=1e-4)

    print("KERNEL_OK")
</pallas_src>

<mosaic_0001>
module attributes {stable_mosaic.version = 11 : i64} {
  func.func @_softmax_mlp_kernel(%arg0: i32, %arg1: memref<16x32xbf16, #tpu.memory_space<vmem>>, %arg2: memref<32x128xbf16, #tpu.memory_space<vmem>>, %arg3: memref<1x128xf32, #tpu.memory_space<vmem>>, %arg4: memref<128x128xbf16, #tpu.memory_space<vmem>>, %arg5: memref<1x128xf32, #tpu.memory_space<vmem>>, %arg6: memref<16x128xf32, #tpu.memory_space<vmem>>) attributes {dimension_semantics = [#tpu.dimension_semantics<parallel>], iteration_bounds = array<i64: 1>, scalar_prefetch = 0 : i64, scratch_operands = 0 : i64, tpu.core_type = #tpu.core_type<tc>, window_params = [{transform_indices = @transform_0, window_bounds = array<i64: 16, 32>}, {pipeline_mode = #tpu.pipeline_mode<synchronous>, transform_indices = @transform_1, window_bounds = array<i64: 32, 128>}, {pipeline_mode = #tpu.pipeline_mode<synchronous>, transform_indices = @transform_2, window_bounds = array<i64: 1, 128>}, {pipeline_mode = #tpu.pipeline_mode<synchronous>, transform_indices = @transform_3, window_bounds = array<i64: 128, 128>}, {pipeline_mode = #tpu.pipeline_mode<synchronous>, transform_indices = @transform_4, window_bounds = array<i64: 1, 128>}, {transform_indices = @transform_5, window_bounds = array<i64: 16, 128>}]} {
    %c0 = arith.constant 0 : index
    %c0_0 = arith.constant 0 : index
    %0 = vector.load %arg1[%c0, %c0_0] : memref<16x32xbf16, #tpu.memory_space<vmem>>, vector<16x32xbf16>
    %c0_1 = arith.constant 0 : index
    %c0_2 = arith.constant 0 : index
    %1 = vector.load %arg2[%c0_1, %c0_2] : memref<32x128xbf16, #tpu.memory_space<vmem>>, vector<32x128xbf16>
    %cst = arith.constant dense<0.000000e+00> : vector<16x128xf32>
    %2 = tpu.matmul %0, %1, %cst {dimension_numbers = #tpu.dot_dimension_numbers<[1], [0], [0], [1], [0, 0, 1, 1], [], []>} : vector<16x32xbf16>, vector<32x128xbf16>, vector<16x128xf32> -> vector<16x128xf32>
    %c0_3 = arith.constant 0 : index
    %c0_4 = arith.constant 0 : index
    %3 = vector.load %arg3[%c0_3, %c0_4] : memref<1x128xf32, #tpu.memory_space<vmem>>, vector<1x128xf32>
    %4 = vector.broadcast %3 : vector<1x128xf32> to vector<16x128xf32>
    %5 = arith.addf %2, %4 : vector<16x128xf32>
    %cst_5 = arith.constant 0.000000e+00 : f32
    %6 = vector.broadcast %cst_5 : f32 to vector<16x128xf32>
    %7 = arith.maximumf %5, %6 : vector<16x128xf32>
    %8 = arith.truncf %7 : vector<16x128xf32> to vector<16x128xbf16>
    %c0_6 = arith.constant 0 : index
    %c0_7 = arith.constant 0 : index
    %9 = vector.load %arg4[%c0_6, %c0_7] : memref<128x128xbf16, #tpu.memory_space<vmem>>, vector<128x128xbf16>
    %cst_8 = arith.constant dense<0.000000e+00> : vector<16x128xf32>
    %10 = tpu.matmul %8, %9, %cst_8 {dimension_numbers = #tpu.dot_dimension_numbers<[1], [0], [0], [1], [0, 0, 1, 1], [], []>} : vector<16x128xbf16>, vector<128x128xbf16>, vector<16x128xf32> -> vector<16x128xf32>
    %c0_9 = arith.constant 0 : index
    %c0_10 = arith.constant 0 : index
    %11 = vector.load %arg5[%c0_9, %c0_10] : memref<1x128xf32, #tpu.memory_space<vmem>>, vector<1x128xf32>
    %12 = vector.broadcast %11 : vector<1x128xf32> to vector<16x128xf32>
    %13 = arith.addf %10, %12 : vector<16x128xf32>
    %cst_11 = arith.constant dense<0xFF800000> : vector<16xf32>
    %14 = vector.multi_reduction <maximumf>, %13, %cst_11 [1] : vector<16x128xf32> to vector<16xf32>
    %15 = vector.shape_cast %14 : vector<16xf32> to vector<16x1xf32>
    %16 = vector.broadcast %15 : vector<16x1xf32> to vector<16x128xf32>
    %17 = arith.subf %13, %16 : vector<16x128xf32>
    %18 = math.exp %17 : vector<16x128xf32>
    %cst_12 = arith.constant dense<0.000000e+00> : vector<16xf32>
    %19 = vector.multi_reduction <add>, %18, %cst_12 [1] : vector<16x128xf32> to vector<16xf32>
    %20 = vector.shape_cast %19 : vector<16xf32> to vector<16x1xf32>
    %21 = vector.broadcast %20 : vector<16x1xf32> to vector<16x128xf32>
    %22 = arith.divf %18, %21 : vector<16x128xf32>
    %c0_13 = arith.constant 0 : index
    %c0_14 = arith.constant 0 : index
    %23 = vector.load %arg6[%c0_13, %c0_14] : memref<16x128xf32, #tpu.memory_space<vmem>>, vector<16x128xf32>
    tpu.vector_store %arg6[%c0_13, %c0_14], %22 {strides = array<i32>} : memref<16x128xf32, #tpu.memory_space<vmem>>, vector<16x128xf32>,
    return
  }
  func.func @transform_0(%arg0: i32) -> (i32, i32) {
    %c0_i32 = arith.constant 0 : i32
    %c0_i32_0 = arith.constant 0 : i32
    return %arg0, %c0_i32 : i32, i32
  }
  func.func @transform_1(%arg0: i32) -> (i32, i32) {
    %c0_i32 = arith.constant 0 : i32
    %c0_i32_0 = arith.constant 0 : i32
    %c0_i32_1 = arith.constant 0 : i32
    return %c0_i32, %c0_i32_0 : i32, i32
  }
  func.func @transform_2(%arg0: i32) -> (i32, i32) {
    %c0_i32 = arith.constant 0 : i32
    %c0_i32_0 = arith.constant 0 : i32
    %c0_i32_1 = arith.constant 0 : i32
    return %c0_i32, %c0_i32_0 : i32, i32
  }
  func.func @transform_3(%arg0: i32) -> (i32, i32) {
    %c0_i32 = arith.constant 0 : i32
    %c0_i32_0 = arith.constant 0 : i32
    %c0_i32_1 = arith.constant 0 : i32
    return %c0_i32, %c0_i32_0 : i32, i32
  }
  func.func @transform_4(%arg0: i32) -> (i32, i32) {
    %c0_i32 = arith.constant 0 : i32
    %c0_i32_0 = arith.constant 0 : i32
    %c0_i32_1 = arith.constant 0 : i32
    return %c0_i32, %c0_i32_0 : i32, i32
  }
  func.func @transform_5(%arg0: i32) -> (i32, i32) {
    %c0_i32 = arith.constant 0 : i32
    %c0_i32_0 = arith.constant 0 : i32
    return %arg0, %c0_i32 : i32, i32
  }
}

module attributes {stable_mosaic.version = 11 : i64} {
  func.func @_softmax_mlp_kernel(%arg0: i32, %arg1: memref<16x32xbf16, #tpu.memory_space<vmem>>, %arg2: memref<32x128xbf16, #tpu.memory_space<vmem>>, %arg3: memref<1x128xf32, #tpu.memory_space<vmem>>, %arg4: memref<128x128xbf16, #tpu.memory_space<vmem>>, %arg5: memref<1x128xf32, #tpu.memory_space<vmem>>, %arg6: memref<16x128xf32, #tpu.memory_space<vmem>>) attributes {dimension_semantics = [#tpu.dimension_semantics<parallel>], iteration_bounds = array<i64: 1>, scalar_prefetch = 0 : i64, scratch_operands = 0 : i64, tpu.core_type = #tpu.core_type<tc>, window_params = [{transform_indices = @transform_0, window_bounds = array<i64: 16, 32>}, {pipeline_mode = #tpu.pipeline_mode<synchronous>, transform_indices = @transform_1, window_bounds = array<i64: 32, 128>}, {pipeline_mode = #tpu.pipeline_mode<synchronous>, transform_indices = @transform_2, window_bounds = array<i64: 1, 128>}, {pipeline_mode = #tpu.pipeline_mode<synchronous>, transform_indices = @transform_3, window_bounds = array<i64: 128, 128>}, {pipeline_mode = #tpu.pipeline_mode<synchronous>, transform_indices = @transform_4, window_bounds = array<i64: 1, 128>}, {transform_indices = @transform_5, window_bounds = array<i64: 16, 128>}]} {
    %c0 = arith.constant 0 : index
    %c0_0 = arith.constant 0 : index
    %0 = vector.load %arg1[%c0, %c0_0] : memref<16x32xbf16, #tpu.memory_space<vmem>>, vector<16x32xbf16>
    %c0_1 = arith.constant 0 : index
    %c0_2 = arith.constant 0 : index
    %1 = vector.load %arg2[%c0_1, %c0_2] : memref<32x128xbf16, #tpu.memory_space<vmem>>, vector<32x128xbf16>
    %cst = arith.constant dense<0.000000e+00> : vector<16x128xf32>
    %2 = tpu.matmul %0, %1, %cst {dimension_numbers = #tpu.dot_dimension_numbers<[1], [0], [0], [1], [0, 0, 1, 1], [], []>} : vector<16x32xbf16>, vector<32x128xbf16>, vector<16x128xf32> -> vector<16x128xf32>
    %c0_3 = arith.constant 0 : index
    %c0_4 = arith.constant 0 : index
    %3 = vector.load %arg3[%c0_3, %c0_4] : memref<1x128xf32, #tpu.memory_space<vmem>>, vector<1x128xf32>
    %4 = vector.broadcast %3 : vector<1x128xf32> to vector<16x128xf32>
    %5 = arith.addf %2, %4 : vector<16x128xf32>
    %cst_5 = arith.constant 0.000000e+00 : f32
    %6 = vector.broadcast %cst_5 : f32 to vector<16x128xf32>
    %7 = arith.maximumf %5, %6 : vector<16x128xf32>
    %8 = arith.truncf %7 : vector<16x128xf32> to vector<16x128xbf16>
    %c0_6 = arith.constant 0 : index
    %c0_7 = arith.constant 0 : index
    %9 = vector.load %arg4[%c0_6, %c0_7] : memref<128x128xbf16, #tpu.memory_space<vmem>>, vector<128x128xbf16>
    %cst_8 = arith.constant dense<0.000000e+00> : vector<16x128xf32>
    %10 = tpu.matmul %8, %9, %cst_8 {dimension_numbers = #tpu.dot_dimension_numbers<[1], [0], [0], [1], [0, 0, 1, 1], [], []>} : vector<16x128xbf16>, vector<128x128xbf16>, vector<16x128xf32> -> vector<16x128xf32>
    %c0_9 = arith.constant 0 : index
    %c0_10 = arith.constant 0 : index
    %11 = vector.load %arg5[%c0_9, %c0_10] : memref<1x128xf32, #tpu.memory_space<vmem>>, vector<1x128xf32>
    %12 = vector.broadcast %11 : vector<1x128xf32> to vector<16x128xf32>
    %13 = arith.addf %10, %12 : vector<16x128xf32>
    %cst_11 = arith.constant dense<0xFF800000> : vector<16xf32>
    %14 = vector.multi_reduction <maximumf>, %13, %cst_11 [1] : vector<16x128xf32> to vector<16xf32>
    %15 = vector.shape_cast %14 : vector<16xf32> to vector<16x1xf32>
    %16 = vector.broadcast %15 : vector<16x1xf32> to vector<16x128xf32>
    %17 = arith.subf %13, %16 : vector<16x128xf32>
    %18 = math.exp %17 : vector<16x128xf32>
    %cst_12 = arith.constant dense<0.000000e+00> : vector<16xf32>
    %19 = vector.multi_reduction <add>, %18, %cst_12 [1] : vector<16x128xf32> to vector<16xf32>
    %20 = vector.shape_cast %19 : vector<16xf32> to vector<16x1xf32>
    %21 = vector.broadcast %20 : vector<16x1xf32> to vector<16x128xf32>
    %22 = arith.divf %18, %21 : vector<16x128xf32>
    %c0_13 = arith.constant 0 : index
    %c0_14 = arith.constant 0 : index
    %23 = vector.load %arg6[%c0_13, %c0_14] : memref<16x128xf32, #tpu.memory_space<vmem>>, vector<16x128xf32>
    tpu.vector_store %arg6[%c0_13, %c0_14], %22 {strides = array<i32>} : memref<16x128xf32, #tpu.memory_space<vmem>>, vector<16x128xf32>,
    return
  }
  func.func @transform_0(%arg0: i32) -> (i32, i32) {
    %c0_i32 = arith.constant 0 : i32
    %c0_i32_0 = arith.constant 0 : i32
    return %arg0, %c0_i32 : i32, i32
  }
  func.func @transform_1(%arg0: i32) -> (i32, i32) {
    %c0_i32 = arith.constant 0 : i32
    %c0_i32_0 = arith.constant 0 : i32
    %c0_i32_1 = arith.constant 0 : i32
    return %c0_i32, %c0_i32_0 : i32, i32
  }
  func.func @transform_2(%arg0: i32) -> (i32, i32) {
    %c0_i32 = arith.constant 0 : i32
    %c0_i32_0 = arith.constant 0 : i32
    %c0_i32_1 = arith.constant 0 : i32
    return %c0_i32, %c0_i32_0 : i32, i32
  }
  func.func @transform_3(%arg0: i32) -> (i32, i32) {
    %c0_i32 = arith.constant 0 : i32
    %c0_i32_0 = arith.constant 0 : i32
    %c0_i32_1 = arith.constant 0 : i32
    return %c0_i32, %c0_i32_0 : i32, i32
  }
  func.func @transform_4(%arg0: i32) -> (i32, i32) {
    %c0_i32 = arith.constant 0 : i32
    %c0_i32_0 = arith.constant 0 : i32
    %c0_i32_1 = arith.constant 0 : i32
    return %c0_i32, %c0_i32_0 : i32, i32
  }
  func.func @transform_5(%arg0: i32) -> (i32, i32) {
    %c0_i32 = arith.constant 0 : i32
    %c0_i32_0 = arith.constant 0 : i32
    return %arg0, %c0_i32 : i32, i32
  }
}

</mosaic_0001>

<llo_original>
// kernel: tpu_custom_call.1
$region0: #{tpu_custom_call.1}
  #allocation0 [shape = 'u32[]', space=smem, size = 0x4, offset = 0x4, fixed_abs, tag = 'smem constant byte address 0x4 - core index']
  #allocation1 [shape = 'u32[144,128]{1,0:T(1,128)}', space=vmem, size = 0x12000, scoped, tag = 'internal scratch']
  %s0 = inlined_call_operand.hbm [shape: bf16[16,32], index: 0, kind: input, shape index: {}]
  %s1 = inlined_call_operand.hbm [shape: bf16[32,128], index: 1, kind: input, shape index: {}]
  %s2 = inlined_call_operand.vmem [shape: f32[1,128], index: 2, kind: input, shape index: {}]
  %s3 = inlined_call_operand.hbm [shape: bf16[128,128], index: 3, kind: input, shape index: {}]
  %s4 = inlined_call_operand.vmem [shape: f32[1,128], index: 4, kind: input, shape index: {}]
  %s5 = inlined_call_operand.hbm [shape: f32[16,128], index: 5, kind: output, shape index: {}]
  %s6 = sld [smem:[#allocation0]]
  $region42: #{tpu_custom_call.1} parent=0
    _
  %s8 = ssub.s32 1, %s6
  %s9 = scalar_select 0, %s8, %s6
  $region1: #{tpu_custom_call.1} parent=0
    #allocation2 [shape = 'u8[4096]{0}', space=vmem, size = 0x1000, scoped, tag = 'input window, operand 0, single buffered']
    #allocation3 [shape = 's32[1]{0}', space=sflag, size = 0x4, scoped, tag = 'scoped memory for tpu_custom_call.1']
    #allocation4 [shape = 's32[1]{0}', space=sflag, size = 0x4, scoped, tag = 'scoped memory for tpu_custom_call.1']
    #allocation5 [shape = 'u8[8192]{0}', space=vmem, size = 0x2000, scoped, tag = 'input window, operand 1, single buffered']
    #allocation6 [shape = 's32[1]{0}', space=sflag, size = 0x4, scoped, tag = 'scoped memory for tpu_custom_call.1']
    #allocation7 [shape = 'u8[32768]{0}', space=vmem, size = 0x8000, scoped, tag = 'input window, operand 3, single buffered']
    #allocation8 [shape = 'u8[8192]{0}', space=vmem, size = 0x2000, scoped, tag = 'output window, operand 0, single buffered']
    %10 = vsyncpa [#allocation3], 0
    %11 = vsyncpa [#allocation6], 0
    %12 = vsyncpa [#allocation4], 0
    // Predicated region
    $region2: #{tpu_custom_call.1} parent=1 // pred_check
      _
    $region3: #{tpu_custom_call.1} parent=1 // pred_check_branch
      %14 = sbr.rel (0) target = $region5
    $region4: #{tpu_custom_call.1} parent=1 // pred_region
      %s16 = ssub.s32 128, 128
      %17 = vsyncadd [#allocation3], %s16
      %s18 = sshll.u32 [#allocation2], 4
      %s19 = int_to_ptr.vmem [resolvable:$true] %s18
      %24 = dma.hbm_to_vmem [thread:$0]  %s0, 128, %s19, [#allocation3], 64, 64, 4
    $region5: #{tpu_custom_call.1} parent=1 // pred_fallthru
      _
    // Predicated region
    $region6: #{tpu_custom_call.1} parent=1 // pred_check
      _
    $region7: #{tpu_custom_call.1} parent=1 // pred_check_branch
      %26 = sbr.rel (0) target = $region9
    $region8: #{tpu_custom_call.1} parent=1 // pred_region
      %s28 = ssub.s32 256, 256
      %29 = vsyncadd [#allocation6], %s28
      %s30 = sshll.u32 [#allocation5], 4
      %s31 = int_to_ptr.vmem [resolvable:$true] %s30
      %36 = dma.hbm_to_vmem [thread:$0]  %s1, 256, %s31, [#allocation6], 64, 64, 4
    $region9: #{tpu_custom_call.1} parent=1 // pred_fallthru
      _
    // Predicated region
    $region10: #{tpu_custom_call.1} parent=1 // pred_check
      _
    $region11: #{tpu_custom_call.1} parent=1 // pred_check_branch
      %38 = sbr.rel (0) target = $region13
    $region12: #{tpu_custom_call.1} parent=1 // pred_region
      _
    $region13: #{tpu_custom_call.1} parent=1 // pred_fallthru
      _
    // Predicated region
    $region14: #{tpu_custom_call.1} parent=1 // pred_check
      _
    $region15: #{tpu_custom_call.1} parent=1 // pred_check_branch
      %40 = sbr.rel (0) target = $region17
    $region16: #{tpu_custom_call.1} parent=1 // pred_region
      %s42 = ssub.s32 1024, 1024
      %43 = vsyncadd [#allocation6], %s42
      %s44 = sshll.u32 [#allocation7], 4
      %s45 = int_to_ptr.vmem [resolvable:$true] %s44
      %50 = dma.hbm_to_vmem [thread:$0]  %s3, 1024, %s45, [#allocation6], 64, 64, 4
    $region17: #{tpu_custom_call.1} parent=1 // pred_fallthru
      _
    // Predicated region
    $region18: #{tpu_custom_call.1} parent=1 // pred_check
      _
    $region19: #{tpu_custom_call.1} parent=1 // pred_check_branch
      %52 = sbr.rel (0) target = $region21
    $region20: #{tpu_custom_call.1} parent=1 // pred_region
      _
    $region21: #{tpu_custom_call.1} parent=1 // pred_fallthru
      _
    // Predicated region
    $region22: #{tpu_custom_call.1} parent=1 // pred_check
      _
    $region23: #{tpu_custom_call.1} parent=1 // pred_check_branch
      %54 = sbr.rel (0) target = $region25
    $region24: #{tpu_custom_call.1} parent=1 // pred_region
      %55 = dma.done [#allocation3], 128
    $region25: #{tpu_custom_call.1} parent=1 // pred_fallthru
      _
    // Predicated region
    $region26: #{tpu_custom_call.1} parent=1 // pred_check
      _
    $region27: #{tpu_custom_call.1} parent=1 // pred_check_branch
      %57 = sbr.rel (0) target = $region29
    $region28: #{tpu_custom_call.1} parent=1 // pred_region
      %58 = dma.done [#allocation6], 256
    $region29: #{tpu_custom_call.1} parent=1 // pred_fallthru
      _
    // Predicated region
    $region30: #{tpu_custom_call.1} parent=1 // pred_check
      _
    $region31: #{tpu_custom_call.1} parent=1 // pred_check_branch
      %60 = sbr.rel (0) target = $region33
    $region32: #{tpu_custom_call.1} parent=1 // pred_region
      %61 = dma.done [#allocation6], 1024
    $region33: #{tpu_custom_call.1} parent=1 // pred_fallthru
      _
    %v63 = vld [vmem:[#allocation2] sm:$0xf]
    %v64 = vld [vmem:[#allocation2 + $0x4] sm:$0xf]
    %v65 = vld [vmem:[#allocation5] sm:$0xf]
    %v66 = vld [vmem:[#allocation5 + $0x4] sm:$0xf]
    %v67 = vld [vmem:[#allocation5 + $0x8] sm:$0xf]
    %v68 = vld [vmem:[#allocation5 + $0xc] sm:$0xf]
    %v69 = vld [vmem:[%s2] sm:$0x1]
    %v71 = vlaneseq
    %v72 = vshrl.u32 %v71, 7
    %v73 = vsub.s32 0, %v72
    %v74 = vrot.slane %v69, %v73
    %v78 = vunpack.c.l.b16 %v63
    %v79 = vunpack.c.l.b16 %v64
    %v80 = vpack.c.b16 %v79, %v78
    %v85 = vunpack.c.l.b16 %v65
    %v86 = vunpack.c.l.b16 %v66
    %v87 = vunpack.c.l.b16 %v67
    %v88 = vunpack.c.l.b16 %v68
    %v89 = vpack.c.b16 %v86, %v85
    %v90 = vpack.c.b16 %v88, %v87
    %vm93 = vcmask 261120
    %v95 = vsel %vm93, %v80, 0
    %97 = vmatprep.subr.bf16.mxu0 0
    %98 = vmatpush1.bf16.msra.mxu0 0
    %99 = vmatprep.subr.bf16.mxu0 0
    %100 = vmatpush1.bf16.msra.mxu0 0
    %101 = vmatprep.subr.bf16.mxu0 0
    %102 = vmatpush1.bf16.msra.mxu0 0
    %103 = vmatprep.subr.bf16.mxu0 0
    %104 = vmatpush1.bf16.msra.mxu0 0
    %105 = vmatprep.subr.bf16.mxu0 0
    %106 = vmatpush1.bf16.msra.mxu0 0
    %107 = vmatprep.subr.bf16.mxu0 0
    %108 = vmatpush1.bf16.msra.mxu0 0
    %109 = vmatprep.subr.bf16.mxu0 0
    %110 = vmatpush1.bf16.msra.mxu0 %v90
    %111 = vmatprep.subr.bf16.mxu0 0
    %112 = vmatpush1.bf16.msra.mxu0 %v89
    %113 = vmatprep.subr.bf16.mxu0 0
    %114 = vmatpush2.bf16.msra.mxu0 0
    %115 = vmatprep.subr.bf16.mxu0 0
    %116 = vmatpush2.bf16.msra.mxu0 0
    %117 = vmatprep.subr.bf16.mxu0 0
    %118 = vmatpush2.bf16.msra.mxu0 0
    %119 = vmatprep.subr.bf16.mxu0 0
    %120 = vmatpush2.bf16.msra.mxu0 0
    %121 = vmatprep.subr.bf16.mxu0 0
    %122 = vmatpush2.bf16.msra.mxu0 0
    %123 = vmatprep.subr.bf16.mxu0 0
    %124 = vmatpush2.bf16.msra.mxu0 0
    %125 = vmatprep.subr.bf16.mxu0 0
    %126 = vmatpush2.bf16.msra.mxu0 0
    %127 = vmatprep.subr.bf16.mxu0 0
    %128 = vmatpush2.bf16.msra.mxu0 0
    %129 = vmatprep.mubr.bf16.mxu0 0
    %130 = vmatmul.mubr.bf16.gmra.mxu0 %v95
    %v131 = vpop.f32.mrf.mxu0
    %v132 = vadd.f32 %v74, %v131
    %v133 = vpop.f32.mrf.mxu0
    %v134 = vpop.f32.mrf.mxu0
    %v135 = vadd.f32 %v74, %v134
    %v136 = vpop.f32.mrf.mxu0
    %137 = vdwg.mxu0
    %v138 = vmax.f32 %v132, 0.0
    %v139 = vmax.f32 %v135, 0.0
    %v140 = vpack.c.bf16 %v139, %v138
    %v141 = vld [vmem:[#allocation7] sm:$0xf]
    %v142 = vld [vmem:[#allocation7 + $0x4] sm:$0xf]
    %v143 = vld [vmem:[#allocation7 + $0x8] sm:$0xf]
    %v144 = vld [vmem:[#allocation7 + $0xc] sm:$0xf]
    %v145 = vld [vmem:[#allocation7 + $0x10] sm:$0xf]
    %v146 = vld [vmem:[#allocation7 + $0x14] sm:$0xf]
    %v147 = vld [vmem:[#allocation7 + $0x18] sm:$0xf]
    %v148 = vld [vmem:[#allocation7 + $0x1c] sm:$0xf]
    %v149 = vld [vmem:[#allocation7 + $0x20] sm:$0xf]
    %v150 = vld [vmem:[#allocation7 + $0x24] sm:$0xf]
    %v151 = vld [vmem:[#allocation7 + $0x28] sm:$0xf]
    %v152 = vld [vmem:[#allocation7 + $0x2c] sm:$0xf]
    %v153 = vld [vmem:[#allocation7 + $0x30] sm:$0xf]
    %v154 = vld [vmem:[#allocation7 + $0x34] sm:$0xf]
    %v155 = vld [vmem:[#allocation7 + $0x38] sm:$0xf]
    %v156 = vld [vmem:[#allocation7 + $0x3c] sm:$0xf]
    %v157 = vld [vmem:[%s4] sm:$0x1]
    %v159 = vlaneseq
    %v160 = vshrl.u32 %v159, 7
    %v161 = vsub.s32 0, %v160
    %v162 = vrot.slane %v157, %v161
    %v180 = vunpack.c.l.b16 %v141
    %v181 = vunpack.c.l.b16 %v142
    %v182 = vunpack.c.l.b16 %v143
    %v183 = vunpack.c.l.b16 %v144
    %v184 = vunpack.c.l.b16 %v145
    %v185 = vunpack.c.l.b16 %v146
    %v186 = vunpack.c.l.b16 %v147
    %v187 = vunpack.c.l.b16 %v148
    %v188 = vunpack.c.l.b16 %v149
    %v189 = vunpack.c.l.b16 %v150
    %v190 = vunpack.c.l.b16 %v151
    %v191 = vunpack.c.l.b16 %v152
    %v192 = vunpack.c.l.b16 %v153
    %v193 = vunpack.c.l.b16 %v154
    %v194 = vunpack.c.l.b16 %v155
    %v195 = vunpack.c.l.b16 %v156
    %v196 = vpack.c.b16 %v181, %v180
    %v197 = vpack.c.b16 %v183, %v182
    %v198 = vpack.c.b16 %v185, %v184
    %v199 = vpack.c.b16 %v187, %v186
    %v200 = vpack.c.b16 %v189, %v188
    %v201 = vpack.c.b16 %v191, %v190
    %v202 = vpack.c.b16 %v193, %v192
    %v203 = vpack.c.b16 %v195, %v194
    %212 = vmatprep.subr.bf16.mxu0 0
    %213 = vmatpush1.bf16.msra.mxu0 %v203
    %214 = vmatprep.subr.bf16.mxu0 0
    %215 = vmatpush1.bf16.msra.mxu0 %v202
    %216 = vmatprep.subr.bf16.mxu0 0
    %217 = vmatpush1.bf16.msra.mxu0 %v201
    %218 = vmatprep.subr.bf16.mxu0 0
    %219 = vmatpush1.bf16.msra.mxu0 %v200
    %220 = vmatprep.subr.bf16.mxu0 0
    %221 = vmatpush1.bf16.msra.mxu0 %v199
    %222 = vmatprep.subr.bf16.mxu0 0
    %223 = vmatpush1.bf16.msra.mxu0 %v198
    %224 = vmatprep.subr.bf16.mxu0 0
    %225 = vmatpush1.bf16.msra.mxu0 %v197
    %226 = vmatprep.subr.bf16.mxu0 0
    %227 = vmatpush1.bf16.msra.mxu0 %v196
    %228 = vmatprep.subr.bf16.mxu0 0
    %229 = vmatpush2.bf16.msra.mxu0 0
    %230 = vmatprep.subr.bf16.mxu0 0
    %231 = vmatpush2.bf16.msra.mxu0 0
    %232 = vmatprep.subr.bf16.mxu0 0
    %233 = vmatpush2.bf16.msra.mxu0 0
    %234 = vmatprep.subr.bf16.mxu0 0
    %235 = vmatpush2.bf16.msra.mxu0 0
    %236 = vmatprep.subr.bf16.mxu0 0
    %237 = vmatpush2.bf16.msra.mxu0 0
    %238 = vmatprep.subr.bf16.mxu0 0
    %239 = vmatpush2.bf16.msra.mxu0 0
    %240 = vmatprep.subr.bf16.mxu0 0
    %241 = vmatpush2.bf16.msra.mxu0 0
    %242 = vmatprep.subr.bf16.mxu0 0
    %243 = vmatpush2.bf16.msra.mxu0 0
    %244 = vmatprep.mubr.bf16.mxu0 0
    %245 = vmatmul.mubr.bf16.gmra.mxu0 %v140
    %v246 = vpop.f32.mrf.mxu0
    %v247 = vadd.f32 %v162, %v246
    %v248 = vpop.f32.mrf.mxu0
    %v249 = vpop.f32.mrf.mxu0
    %v250 = vadd.f32 %v162, %v249
    %v251 = vpop.f32.mrf.mxu0
    %252 = vdwg.mxu0
    %253 = vmax.xlane.f32.xlu0 %v247
    %v254 = vpop.xlane.xlu0 %253
    %255 = vmax.xlane.f32.xlu0 %v250
    %v256 = vpop.xlane.xlu0 %255
    %v257 = vsub.f32 %v247, %v254
    %v258 = vsub.f32 %v250, %v256
    %v259 = vmul.f32 %v257, 1.442695
    %v260 = vpow.pop %v259
    %v261 = vmul.f32 %v258, 1.442695
    %v262 = vpow.pop %v261
    %263 = vadd.xlane.f32.xlu0 %v260
    %v264 = vpop.xlane.xlu0 %263
    %265 = vadd.xlane.f32.xlu0 %v262
    %v266 = vpop.xlane.xlu0 %265
    %v267 = vrcp.pop %v264
    %v268 = vmul.f32 %v260, %v267
    %v269 = vrcp.pop %v266
    %v270 = vmul.f32 %v262, %v269
    %271 = vst [vmem:[#allocation8] sm:$0xff] %v268
    %272 = vst [vmem:[#allocation8 + $0x8] sm:$0xff] %v270
    // Predicated region
    $region34: #{tpu_custom_call.1} parent=1 // pred_check
      _
    $region35: #{tpu_custom_call.1} parent=1 // pred_check_branch
      %274 = sbr.rel (0) target = $region37
    $region36: #{tpu_custom_call.1} parent=1 // pred_region
      %s276 = ssub.s32 256, 256
      %277 = vsyncadd [#allocation4], %s276
      %s278 = sshll.u32 [#allocation8], 4
      %s279 = int_to_ptr.vmem [resolvable:$true] %s278
      %284 = dma.vmem_to_hbm [thread:$0]  %s279, 256, %s5, [#allocation4], 128, 128, 8
    $region37: #{tpu_custom_call.1} parent=1 // pred_fallthru
      _
    // Predicated region
    $region38: #{tpu_custom_call.1} parent=1 // pred_check
      _
    $region39: #{tpu_custom_call.1} parent=1 // pred_check_branch
      %286 = sbr.rel (0) target = $region41
    $region40: #{tpu_custom_call.1} parent=1 // pred_region
      %287 = dma.done [#allocation4], 256
    $region41: #{tpu_custom_call.1} parent=1 // pred_fallthru
      _
    %288 = vsyncpa [#allocation3], 1
    %289 = vsyncpa [#allocation6], 1
    %290 = vsyncpa [#allocation4], 1

// kernel: tpu_custom_call.1
$region0: #{tpu_custom_call.1}
  #allocation0 [shape = 'u32[]', space=smem, size = 0x4, offset = 0x4, fixed_abs, tag = 'smem constant byte address 0x4 - core index']
  #allocation1 [shape = 'u32[144,128]{1,0:T(1,128)}', space=vmem, size = 0x12000, scoped, tag = 'internal scratch']
  %s0 = inlined_call_operand.hbm [shape: bf16[16,32], index: 0, kind: input, shape index: {}]
  %s1 = inlined_call_operand.hbm [shape: bf16[32,128], index: 1, kind: input, shape index: {}]
  %s2 = inlined_call_operand.vmem [shape: f32[1,128], index: 2, kind: input, shape index: {}]
  %s3 = inlined_call_operand.hbm [shape: bf16[128,128], index: 3, kind: input, shape index: {}]
  %s4 = inlined_call_operand.vmem [shape: f32[1,128], index: 4, kind: input, shape index: {}]
  %s5 = inlined_call_operand.hbm [shape: f32[16,128], index: 5, kind: output, shape index: {}]
  %s6 = sld [smem:[#allocation0]]
  $region42: #{tpu_custom_call.1} parent=0
    _
  %s8 = ssub.s32 1, %s6
  %s9 = scalar_select 0, %s8, %s6
  $region1: #{tpu_custom_call.1} parent=0
    #allocation2 [shape = 'u8[4096]{0}', space=vmem, size = 0x1000, scoped, tag = 'input window, operand 0, single buffered']
    #allocation3 [shape = 's32[1]{0}', space=sflag, size = 0x4, scoped, tag = 'scoped memory for tpu_custom_call.1']
    #allocation4 [shape = 's32[1]{0}', space=sflag, size = 0x4, scoped, tag = 'scoped memory for tpu_custom_call.1']
    #allocation5 [shape = 'u8[8192]{0}', space=vmem, size = 0x2000, scoped, tag = 'input window, operand 1, single buffered']
    #allocation6 [shape = 's32[1]{0}', space=sflag, size = 0x4, scoped, tag = 'scoped memory for tpu_custom_call.1']
    #allocation7 [shape = 'u8[32768]{0}', space=vmem, size = 0x8000, scoped, tag = 'input window, operand 3, single buffered']
    #allocation8 [shape = 'u8[8192]{0}', space=vmem, size = 0x2000, scoped, tag = 'output window, operand 0, single buffered']
    %10 = vsyncpa [#allocation3], 0
    %11 = vsyncpa [#allocation6], 0
    %12 = vsyncpa [#allocation4], 0
    // Predicated region
    $region2: #{tpu_custom_call.1} parent=1 // pred_check
      _
    $region3: #{tpu_custom_call.1} parent=1 // pred_check_branch
      %14 = sbr.rel (0) target = $region5
    $region4: #{tpu_custom_call.1} parent=1 // pred_region
      %s16 = ssub.s32 128, 128
      %17 = vsyncadd [#allocation3], %s16
      %s18 = sshll.u32 [#allocation2], 4
      %s19 = int_to_ptr.vmem [resolvable:$true] %s18
      %24 = dma.hbm_to_vmem [thread:$0]  %s0, 128, %s19, [#allocation3], 64, 64, 4
    $region5: #{tpu_custom_call.1} parent=1 // pred_fallthru
      _
    // Predicated region
    $region6: #{tpu_custom_call.1} parent=1 // pred_check
      _
    $region7: #{tpu_custom_call.1} parent=1 // pred_check_branch
      %26 = sbr.rel (0) target = $region9
    $region8: #{tpu_custom_call.1} parent=1 // pred_region
      %s28 = ssub.s32 256, 256
      %29 = vsyncadd [#allocation6], %s28
      %s30 = sshll.u32 [#allocation5], 4
      %s31 = int_to_ptr.vmem [resolvable:$true] %s30
      %36 = dma.hbm_to_vmem [thread:$0]  %s1, 256, %s31, [#allocation6], 64, 64, 4
    $region9: #{tpu_custom_call.1} parent=1 // pred_fallthru
      _
    // Predicated region
    $region10: #{tpu_custom_call.1} parent=1 // pred_check
      _
    $region11: #{tpu_custom_call.1} parent=1 // pred_check_branch
      %38 = sbr.rel (0) target = $region13
    $region12: #{tpu_custom_call.1} parent=1 // pred_region
      _
    $region13: #{tpu_custom_call.1} parent=1 // pred_fallthru
      _
    // Predicated region
    $region14: #{tpu_custom_call.1} parent=1 // pred_check
      _
    $region15: #{tpu_custom_call.1} parent=1 // pred_check_branch
      %40 = sbr.rel (0) target = $region17
    $region16: #{tpu_custom_call.1} parent=1 // pred_region
      %s42 = ssub.s32 1024, 1024
      %43 = vsyncadd [#allocation6], %s42
      %s44 = sshll.u32 [#allocation7], 4
      %s45 = int_to_ptr.vmem [resolvable:$true] %s44
      %50 = dma.hbm_to_vmem [thread:$0]  %s3, 1024, %s45, [#allocation6], 64, 64, 4
    $region17: #{tpu_custom_call.1} parent=1 // pred_fallthru
      _
    // Predicated region
    $region18: #{tpu_custom_call.1} parent=1 // pred_check
      _
    $region19: #{tpu_custom_call.1} parent=1 // pred_check_branch
      %52 = sbr.rel (0) target = $region21
    $region20: #{tpu_custom_call.1} parent=1 // pred_region
      _
    $region21: #{tpu_custom_call.1} parent=1 // pred_fallthru
      _
    // Predicated region
    $region22: #{tpu_custom_call.1} parent=1 // pred_check
      _
    $region23: #{tpu_custom_call.1} parent=1 // pred_check_branch
      %54 = sbr.rel (0) target = $region25
    $region24: #{tpu_custom_call.1} parent=1 // pred_region
      %55 = dma.done [#allocation3], 128
    $region25: #{tpu_custom_call.1} parent=1 // pred_fallthru
      _
    // Predicated region
    $region26: #{tpu_custom_call.1} parent=1 // pred_check
      _
    $region27: #{tpu_custom_call.1} parent=1 // pred_check_branch
      %57 = sbr.rel (0) target = $region29
    $region28: #{tpu_custom_call.1} parent=1 // pred_region
      %58 = dma.done [#allocation6], 256
    $region29: #{tpu_custom_call.1} parent=1 // pred_fallthru
      _
    // Predicated region
    $region30: #{tpu_custom_call.1} parent=1 // pred_check
      _
    $region31: #{tpu_custom_call.1} parent=1 // pred_check_branch
      %60 = sbr.rel (0) target = $region33
    $region32: #{tpu_custom_call.1} parent=1 // pred_region
      %61 = dma.done [#allocation6], 1024
    $region33: #{tpu_custom_call.1} parent=1 // pred_fallthru
      _
    %v63 = vld [vmem:[#allocation2] sm:$0xf]
    %v64 = vld [vmem:[#allocation2 + $0x4] sm:$0xf]
    %v65 = vld [vmem:[#allocation5] sm:$0xf]
    %v66 = vld [vmem:[#allocation5 + $0x4] sm:$0xf]
    %v67 = vld [vmem:[#allocation5 + $0x8] sm:$0xf]
    %v68 = vld [vmem:[#allocation5 + $0xc] sm:$0xf]
    %v69 = vld [vmem:[%s2] sm:$0x1]
    %v71 = vlaneseq
    %v72 = vshrl.u32 %v71, 7
    %v73 = vsub.s32 0, %v72
    %v74 = vrot.slane %v69, %v73
    %v78 = vunpack.c.l.b16 %v63
    %v79 = vunpack.c.l.b16 %v64
    %v80 = vpack.c.b16 %v79, %v78
    %v85 = vunpack.c.l.b16 %v65
    %v86 = vunpack.c.l.b16 %v66
    %v87 = vunpack.c.l.b16 %v67
    %v88 = vunpack.c.l.b16 %v68
    %v89 = vpack.c.b16 %v86, %v85
    %v90 = vpack.c.b16 %v88, %v87
    %vm93 = vcmask 261120
    %v95 = vsel %vm93, %v80, 0
    %97 = vmatprep.subr.bf16.mxu0 0
    %98 = vmatpush1.bf16.msra.mxu0 0
    %99 = vmatprep.subr.bf16.mxu0 0
    %100 = vmatpush1.bf16.msra.mxu0 0
    %101 = vmatprep.subr.bf16.mxu0 0
    %102 = vmatpush1.bf16.msra.mxu0 0
    %103 = vmatprep.subr.bf16.mxu0 0
    %104 = vmatpush1.bf16.msra.mxu0 0
    %105 = vmatprep.subr.bf16.mxu0 0
    %106 = vmatpush1.bf16.msra.mxu0 0
    %107 = vmatprep.subr.bf16.mxu0 0
    %108 = vmatpush1.bf16.msra.mxu0 0
    %109 = vmatprep.subr.bf16.mxu0 0
    %110 = vmatpush1.bf16.msra.mxu0 %v90
    %111 = vmatprep.subr.bf16.mxu0 0
    %112 = vmatpush1.bf16.msra.mxu0 %v89
    %113 = vmatprep.subr.bf16.mxu0 0
    %114 = vmatpush2.bf16.msra.mxu0 0
    %115 = vmatprep.subr.bf16.mxu0 0
    %116 = vmatpush2.bf16.msra.mxu0 0
    %117 = vmatprep.subr.bf16.mxu0 0
    %118 = vmatpush2.bf16.msra.mxu0 0
    %119 = vmatprep.subr.bf16.mxu0 0
    %120 = vmatpush2.bf16.msra.mxu0 0
    %121 = vmatprep.subr.bf16.mxu0 0
    %122 = vmatpush2.bf16.msra.mxu0 0
    %123 = vmatprep.subr.bf16.mxu0 0
    %124 = vmatpush2.bf16.msra.mxu0 0
    %125 = vmatprep.subr.bf16.mxu0 0
    %126 = vmatpush2.bf16.msra.mxu0 0
    %127 = vmatprep.subr.bf16.mxu0 0
    %128 = vmatpush2.bf16.msra.mxu0 0
    %129 = vmatprep.mubr.bf16.mxu0 0
    %130 = vmatmul.mubr.bf16.gmra.mxu0 %v95
    %v131 = vpop.f32.mrf.mxu0
    %v132 = vadd.f32 %v74, %v131
    %v133 = vpop.f32.mrf.mxu0
    %v134 = vpop.f32.mrf.mxu0
    %v135 = vadd.f32 %v74, %v134
    %v136 = vpop.f32.mrf.mxu0
    %137 = vdwg.mxu0
    %v138 = vmax.f32 %v132, 0.0
    %v139 = vmax.f32 %v135, 0.0
    %v140 = vpack.c.bf16 %v139, %v138
    %v141 = vld [vmem:[#allocation7] sm:$0xf]
    %v142 = vld [vmem:[#allocation7 + $0x4] sm:$0xf]
    %v143 = vld [vmem:[#allocation7 + $0x8] sm:$0xf]
    %v144 = vld [vmem:[#allocation7 + $0xc] sm:$0xf]
    %v145 = vld [vmem:[#allocation7 + $0x10] sm:$0xf]
    %v146 = vld [vmem:[#allocation7 + $0x14] sm:$0xf]
    %v147 = vld [vmem:[#allocation7 + $0x18] sm:$0xf]
    %v148 = vld [vmem:[#allocation7 + $0x1c] sm:$0xf]
    %v149 = vld [vmem:[#allocation7 + $0x20] sm:$0xf]
    %v150 = vld [vmem:[#allocation7 + $0x24] sm:$0xf]
    %v151 = vld [vmem:[#allocation7 + $0x28] sm:$0xf]
    %v152 = vld [vmem:[#allocation7 + $0x2c] sm:$0xf]
    %v153 = vld [vmem:[#allocation7 + $0x30] sm:$0xf]
    %v154 = vld [vmem:[#allocation7 + $0x34] sm:$0xf]
    %v155 = vld [vmem:[#allocation7 + $0x38] sm:$0xf]
    %v156 = vld [vmem:[#allocation7 + $0x3c] sm:$0xf]
    %v157 = vld [vmem:[%s4] sm:$0x1]
    %v159 = vlaneseq
    %v160 = vshrl.u32 %v159, 7
    %v161 = vsub.s32 0, %v160
    %v162 = vrot.slane %v157, %v161
    %v180 = vunpack.c.l.b16 %v141
    %v181 = vunpack.c.l.b16 %v142
    %v182 = vunpack.c.l.b16 %v143
    %v183 = vunpack.c.l.b16 %v144
    %v184 = vunpack.c.l.b16 %v145
    %v185 = vunpack.c.l.b16 %v146
    %v186 = vunpack.c.l.b16 %v147
    %v187 = vunpack.c.l.b16 %v148
    %v188 = vunpack.c.l.b16 %v149
    %v189 = vunpack.c.l.b16 %v150
    %v190 = vunpack.c.l.b16 %v151
    %v191 = vunpack.c.l.b16 %v152
    %v192 = vunpack.c.l.b16 %v153
    %v193 = vunpack.c.l.b16 %v154
    %v194 = vunpack.c.l.b16 %v155
    %v195 = vunpack.c.l.b16 %v156
    %v196 = vpack.c.b16 %v181, %v180
    %v197 = vpack.c.b16 %v183, %v182
    %v198 = vpack.c.b16 %v185, %v184
    %v199 = vpack.c.b16 %v187, %v186
    %v200 = vpack.c.b16 %v189, %v188
    %v201 = vpack.c.b16 %v191, %v190
    %v202 = vpack.c.b16 %v193, %v192
    %v203 = vpack.c.b16 %v195, %v194
    %212 = vmatprep.subr.bf16.mxu0 0
    %213 = vmatpush1.bf16.msra.mxu0 %v203
    %214 = vmatprep.subr.bf16.mxu0 0
    %215 = vmatpush1.bf16.msra.mxu0 %v202
    %216 = vmatprep.subr.bf16.mxu0 0
    %217 = vmatpush1.bf16.msra.mxu0 %v201
    %218 = vmatprep.subr.bf16.mxu0 0
    %219 = vmatpush1.bf16.msra.mxu0 %v200
    %220 = vmatprep.subr.bf16.mxu0 0
    %221 = vmatpush1.bf16.msra.mxu0 %v199
    %222 = vmatprep.subr.bf16.mxu0 0
    %223 = vmatpush1.bf16.msra.mxu0 %v198
    %224 = vmatprep.subr.bf16.mxu0 0
    %225 = vmatpush1.bf16.msra.mxu0 %v197
    %226 = vmatprep.subr.bf16.mxu0 0
    %227 = vmatpush1.bf16.msra.mxu0 %v196
    %228 = vmatprep.subr.bf16.mxu0 0
    %229 = vmatpush2.bf16.msra.mxu0 0
    %230 = vmatprep.subr.bf16.mxu0 0
    %231 = vmatpush2.bf16.msra.mxu0 0
    %232 = vmatprep.subr.bf16.mxu0 0
    %233 = vmatpush2.bf16.msra.mxu0 0
    %234 = vmatprep.subr.bf16.mxu0 0
    %235 = vmatpush2.bf16.msra.mxu0 0
    %236 = vmatprep.subr.bf16.mxu0 0
    %237 = vmatpush2.bf16.msra.mxu0 0
    %238 = vmatprep.subr.bf16.mxu0 0
    %239 = vmatpush2.bf16.msra.mxu0 0
    %240 = vmatprep.subr.bf16.mxu0 0
    %241 = vmatpush2.bf16.msra.mxu0 0
    %242 = vmatprep.subr.bf16.mxu0 0
    %243 = vmatpush2.bf16.msra.mxu0 0
    %244 = vmatprep.mubr.bf16.mxu0 0
    %245 = vmatmul.mubr.bf16.gmra.mxu0 %v140
    %v246 = vpop.f32.mrf.mxu0
    %v247 = vadd.f32 %v162, %v246
    %v248 = vpop.f32.mrf.mxu0
    %v249 = vpop.f32.mrf.mxu0
    %v250 = vadd.f32 %v162, %v249
    %v251 = vpop.f32.mrf.mxu0
    %252 = vdwg.mxu0
    %253 = vmax.xlane.f32.xlu0 %v247
    %v254 = vpop.xlane.xlu0 %253
    %255 = vmax.xlane.f32.xlu0 %v250
    %v256 = vpop.xlane.xlu0 %255
    %v257 = vsub.f32 %v247, %v254
    %v258 = vsub.f32 %v250, %v256
    %v259 = vmul.f32 %v257, 1.442695
    %v260 = vpow.pop %v259
    %v261 = vmul.f32 %v258, 1.442695
    %v262 = vpow.pop %v261
    %263 = vadd.xlane.f32.xlu0 %v260
    %v264 = vpop.xlane.xlu0 %263
    %265 = vadd.xlane.f32.xlu0 %v262
    %v266 = vpop.xlane.xlu0 %265
    %v267 = vrcp.pop %v264
    %v268 = vmul.f32 %v260, %v267
    %v269 = vrcp.pop %v266
    %v270 = vmul.f32 %v262, %v269
    %271 = vst [vmem:[#allocation8] sm:$0xff] %v268
    %272 = vst [vmem:[#allocation8 + $0x8] sm:$0xff] %v270
    // Predicated region
    $region34: #{tpu_custom_call.1} parent=1 // pred_check
      _
    $region35: #{tpu_custom_call.1} parent=1 // pred_check_branch
      %274 = sbr.rel (0) target = $region37
    $region36: #{tpu_custom_call.1} parent=1 // pred_region
      %s276 = ssub.s32 256, 256
      %277 = vsyncadd [#allocation4], %s276
      %s278 = sshll.u32 [#allocation8], 4
      %s279 = int_to_ptr.vmem [resolvable:$true] %s278
      %284 = dma.vmem_to_hbm [thread:$0]  %s279, 256, %s5, [#allocation4], 128, 128, 8
    $region37: #{tpu_custom_call.1} parent=1 // pred_fallthru
      _
    // Predicated region
    $region38: #{tpu_custom_call.1} parent=1 // pred_check
      _
    $region39: #{tpu_custom_call.1} parent=1 // pred_check_branch
      %286 = sbr.rel (0) target = $region41
    $region40: #{tpu_custom_call.1} parent=1 // pred_region
      %287 = dma.done [#allocation4], 256
    $region41: #{tpu_custom_call.1} parent=1 // pred_fallthru
      _
    %288 = vsyncpa [#allocation3], 1
    %289 = vsyncpa [#allocation6], 1
    %290 = vsyncpa [#allocation4], 1

</llo_original>
